<compile_context>
chip_gen: v5e
topology: v5e:2x2
jax: 0.10.0
libtpu: 0.0.40
codegen_flags: <defaults>
</compile_context>

<pallas_src>
import functools
import math

import jax
import jax.numpy as jnp
from jax.experimental import pallas as pl
from jax.experimental.pallas import tpu as pltpu

_HALF_PI = math.pi / 2.0   # channel 0 (lat) scale; channel 1 (lon) scale = pi
_LANE = 128


def _regression_head_kernel(x_ref, gps_ref, *, use_tanh):
    # x_ref / gps_ref: (TILE_R, 128) dense tiles of the flat (B*2,) buffer.
    y = x_ref[...].astype(jnp.float32)
    if use_tanh:
        y = jnp.tanh(y)                      # EUP; output already in [-1, 1] -> no clip
    else:
        y = jnp.clip(y, -1.0, 1.0)

    # Flat element index = r*128 + lane; 128 is even, so channel == lane & 1.
    #   even lane -> lat -> pi/2 ; odd lane -> lon -> pi.
    lane = jax.lax.broadcasted_iota(jnp.int32, y.shape, 1)
    scale = _HALF_PI * (1.0 + (lane & 1).astype(jnp.float32))

    gps_ref[...] = (y * scale).astype(gps_ref.dtype)


def regression_head(x, *, use_tanh=False, tile_rows=512, out_dtype=jnp.float32):
    """Pallas equivalent of RegressionHead.forward.

    x: (B, 2) array (backbone output: normalized lat/lon).
    Returns {'gps': (B, 2) float32}.
    """
    B, C = x.shape
    assert C == 2, "RegressionHead / UnormGPS expects 2 channels (lat, lon)"
    total = B * C

    flat = x.reshape(total)                          # free view (row-major contiguous)
    padded_total = pl.cdiv(total, _LANE) * _LANE
    if padded_total != total:                        # only when B % 64 != 0
        flat = jnp.pad(flat, (0, padded_total - total))
    rows = padded_total // _LANE
    x2d = flat.reshape(rows, _LANE)                  # free view, fully lane-dense

    # Row tile: multiple of 8 (sublane-dense) or the full row count (always legal).
    tile_rows = max(8, (int(tile_rows) // 8) * 8)
    if rows <= tile_rows:
        tile_r, grid_r = rows, 1
    else:
        tile_r, grid_r = tile_rows, pl.cdiv(rows, tile_rows)

    kernel = functools.partial(_regression_head_kernel, use_tanh=use_tanh)
    gps2d = pl.pallas_call(
        kernel,
        out_shape=jax.ShapeDtypeStruct((rows, _LANE), out_dtype),
        grid=(grid_r,),
        in_specs=[pl.BlockSpec((tile_r, _LANE), lambda i: (i, 0))],
        out_specs=pl.BlockSpec((tile_r, _LANE), lambda i: (i, 0)),
        compiler_params=pltpu.CompilerParams(
            dimension_semantics=("parallel",)),
    )(x2d)

    gps_flat = gps2d.reshape(padded_total)           # free view
    if padded_total != total:
        gps_flat = gps_flat[:total]
    return {"gps": gps_flat.reshape(B, C)}           # free view


def _reference(x, use_tanh=False):
    # Pure-JAX reference mirroring the PyTorch forward (tanh -> clamp -> scale).
    y = x.astype(jnp.float32)
    if use_tanh:
        y = jnp.tanh(y)
    y = jnp.clip(y, -1.0, 1.0)
    return y * jnp.array([_HALF_PI, math.pi], dtype=jnp.float32)


if __name__ == "__main__":
    key = jax.random.PRNGKey(0)
    # (B, tile_rows): unaligned tail (pad+slice path), 128-aligned single block,
    # and a forced multi-step grid with a partial boundary block.
    cases = [(10, 512), (192, 512), (1234, 8)]
    for B, tr in cases:
        xk = jax.random.fold_in(key, B)
        x = 2.5 * jax.random.normal(xk, (B, 2), dtype=jnp.float32)
        for use_tanh in (False, True):
            out = regression_head(x, use_tanh=use_tanh, tile_rows=tr)
            gps = jax.block_until_ready(out["gps"])
            ref = _reference(x, use_tanh=use_tanh)
            assert gps.shape == (B, 2)
            assert gps.dtype == jnp.float32
            assert jnp.allclose(gps, ref, atol=1e-5, rtol=1e-5), \
                f"mismatch vs reference (B={B}, tile_rows={tr}, use_tanh={use_tanh})"
    print("KERNEL_OK")
</pallas_src>

<mosaic_0001>
module attributes {stable_mosaic.version = 11 : i64} {
  func.func @_regression_head_kernel(%arg0: i32, %arg1: memref<1x128xf32, #tpu.memory_space<vmem>>, %arg2: memref<1x128xf32, #tpu.memory_space<vmem>>) attributes {dimension_semantics = [#tpu.dimension_semantics<parallel>], iteration_bounds = array<i64: 1>, scalar_prefetch = 0 : i64, scratch_operands = 0 : i64, tpu.core_type = #tpu.core_type<tc>, window_params = [{transform_indices = @transform_0, window_bounds = array<i64: 1, 128>}, {transform_indices = @transform_1, window_bounds = array<i64: 1, 128>}]} {
    %c0 = arith.constant 0 : index
    %c0_0 = arith.constant 0 : index
    %0 = vector.load %arg1[%c0, %c0_0] : memref<1x128xf32, #tpu.memory_space<vmem>>, vector<1x128xf32>
    %cst = arith.constant -1.000000e+00 : f32
    %cst_1 = arith.constant 1.000000e+00 : f32
    %1 = vector.broadcast %cst : f32 to vector<1x128xf32>
    %2 = arith.maximumf %1, %0 : vector<1x128xf32>
    %3 = vector.broadcast %cst_1 : f32 to vector<1x128xf32>
    %4 = arith.minimumf %3, %2 : vector<1x128xf32>
    %5 = tpu.iota {dimensions = array<i32: 1>} : vector<1x128xi32>
    %c1_i32 = arith.constant 1 : i32
    %6 = vector.broadcast %c1_i32 : i32 to vector<1x128xi32>
    %7 = arith.andi %5, %6 : vector<1x128xi32>
    %8 = arith.sitofp %7 : vector<1x128xi32> to vector<1x128xf32>
    %cst_2 = arith.constant 1.000000e+00 : f32
    %9 = vector.broadcast %cst_2 : f32 to vector<1x128xf32>
    %10 = arith.addf %9, %8 : vector<1x128xf32>
    %cst_3 = arith.constant 1.57079637 : f32
    %11 = vector.broadcast %cst_3 : f32 to vector<1x128xf32>
    %12 = arith.mulf %11, %10 : vector<1x128xf32>
    %13 = arith.mulf %4, %12 : vector<1x128xf32>
    %c0_4 = arith.constant 0 : index
    %c0_5 = arith.constant 0 : index
    %14 = vector.load %arg2[%c0_4, %c0_5] : memref<1x128xf32, #tpu.memory_space<vmem>>, vector<1x128xf32>
    tpu.vector_store %arg2[%c0_4, %c0_5], %13 {strides = array<i32>} : memref<1x128xf32, #tpu.memory_space<vmem>>, vector<1x128xf32>,
    return
  }
  func.func @transform_0(%arg0: i32) -> (i32, i32) {
    %c0_i32 = arith.constant 0 : i32
    %c0_i32_0 = arith.constant 0 : i32
    return %arg0, %c0_i32 : i32, i32
  }
  func.func @transform_1(%arg0: i32) -> (i32, i32) {
    %c0_i32 = arith.constant 0 : i32
    %c0_i32_0 = arith.constant 0 : i32
    return %arg0, %c0_i32 : i32, i32
  }
}

</mosaic_0001>

<llo_original>
// kernel: tpu_custom_call.1
$region0: #{tpu_custom_call.1}
  #allocation0 [shape = 'u32[]', space=smem, size = 0x4, offset = 0x4, fixed_abs, tag = 'smem constant byte address 0x4 - core index']
  #allocation1 [shape = 'u32[72,128]{1,0:T(1,128)}', space=vmem, size = 0x9000, scoped, tag = 'internal scratch']
  %s0 = inlined_call_operand.hbm [shape: f32[1,128], index: 0, kind: input, shape index: {}]
  %s1 = inlined_call_operand.hbm [shape: f32[1,128], index: 1, kind: output, shape index: {}]
  %s2 = sld [smem:[#allocation0]]
  $region18: #{tpu_custom_call.1} parent=0
    _
  %s4 = ssub.s32 1, %s2
  %s5 = scalar_select 0, %s4, %s2
  $region1: #{tpu_custom_call.1} parent=0
    #allocation2 [shape = 'u8[512]{0}', space=vmem, size = 0x400, scoped, tag = 'input window, operand 0, single buffered']
    #allocation3 [shape = 's32[1]{0}', space=sflag, size = 0x4, scoped, tag = 'scoped memory for tpu_custom_call.1']
    #allocation4 [shape = 's32[1]{0}', space=sflag, size = 0x4, scoped, tag = 'scoped memory for tpu_custom_call.1']
    #allocation5 [shape = 'u8[512]{0}', space=vmem, size = 0x400, scoped, tag = 'output window, operand 0, single buffered']
    %6 = vsyncpa [#allocation3], 0
    %7 = vsyncpa [#allocation4], 0
    // Predicated region
    $region2: #{tpu_custom_call.1} parent=1 // pred_check
      _
    $region3: #{tpu_custom_call.1} parent=1 // pred_check_branch
      %9 = sbr.rel (0) target = $region5
    $region4: #{tpu_custom_call.1} parent=1 // pred_region
      %11 = vsyncadd [#allocation3], 0
      %s13 = sshll.u32 %s0, 4
      %s14 = int_to_ptr.hbm [resolvable:$true] %s13
      %s15 = sshll.u32 [#allocation2], 4
      %s16 = int_to_ptr.vmem [resolvable:$true] %s15
      %18 = dma.hbm_to_vmem [thread:$0]  %s14, 16, %s16, [#allocation3]
    $region5: #{tpu_custom_call.1} parent=1 // pred_fallthru
      _
    // Predicated region
    $region6: #{tpu_custom_call.1} parent=1 // pred_check
      _
    $region7: #{tpu_custom_call.1} parent=1 // pred_check_branch
      %20 = sbr.rel (0) target = $region9
    $region8: #{tpu_custom_call.1} parent=1 // pred_region
      %22 = dma.done [#allocation3], 16
    $region9: #{tpu_custom_call.1} parent=1 // pred_fallthru
      _
    %v23 = vld [vmem:[#allocation2] sm:$0x1]
    %v24 = vmax.f32 %v23, -1.0
    %v25 = vmin.f32 %v24, 1.0
    %v26 = vlaneseq
    %v27 = vand.u32 %v26, 127
    %v28 = vand.u32 %v27, 1
    %v29 = vcvt.s32.f32 %v28
    %v30 = vadd.f32 %v29, 1.0
    %v31 = vmul.f32 %v30, 1.5707964
    %v32 = vmul.f32 %v25, %v31
    %33 = vst [vmem:[#allocation5] sm:$0x1] %v32
    // Predicated region
    $region10: #{tpu_custom_call.1} parent=1 // pred_check
      _
    $region11: #{tpu_custom_call.1} parent=1 // pred_check_branch
      %35 = sbr.rel (0) target = $region13
    $region12: #{tpu_custom_call.1} parent=1 // pred_region
      %37 = vsyncadd [#allocation4], 0
      %s39 = sshll.u32 [#allocation5], 4
      %s40 = int_to_ptr.vmem [resolvable:$true] %s39
      %s41 = sshll.u32 %s1, 4
      %s42 = int_to_ptr.hbm [resolvable:$true] %s41
      %44 = dma.vmem_to_hbm [thread:$0]  %s40, 16, %s42, [#allocation4]
    $region13: #{tpu_custom_call.1} parent=1 // pred_fallthru
      _
    // Predicated region
    $region14: #{tpu_custom_call.1} parent=1 // pred_check
      _
    $region15: #{tpu_custom_call.1} parent=1 // pred_check_branch
      %46 = sbr.rel (0) target = $region17
    $region16: #{tpu_custom_call.1} parent=1 // pred_region
      %48 = dma.done [#allocation4], 16
    $region17: #{tpu_custom_call.1} parent=1 // pred_fallthru
      _
    %49 = vsyncpa [#allocation3], 1
    %50 = vsyncpa [#allocation4], 1

</llo_original>
